<compile_context>
chip_gen: v5e
topology: v5e:2x2
jax: 0.10.0
libtpu: 0.0.40
codegen_flags: <defaults>
</compile_context>

<pallas_src>
import jax
import jax.numpy as jnp
from jax.experimental import pallas as pl
from jax.experimental.pallas import tpu as pltpu

_MAX_TILE_BYTES = 8 * 1024 * 1024     # per-tile budget (amortizes per-step overhead on v7x HBM)
_VMEM_LIMIT_BYTES = 48 * 1024 * 1024  # 4 live buffers (2 in + 2 out double-buffers = 32 MiB)
                                      # + headroom; < 64 MiB v7x physical VMEM,
                                      # > 16/32 MiB v5e/v6e scoped defaults.


def _identity_kernel(x_ref, o_ref):
    # Elementwise pass-through of the current (tr, D) tile.
    # TODO(synk): for a real LayerNorm, compute mean/var in f32 over the lane
    # axis here, use jax.lax.rsqrt (EUP slot), and give gamma/beta a BlockSpec
    # whose index_map always returns block 0 so they stay VMEM-resident.
    o_ref[...] = x_ref[...]


def _sublane_align(dtype):
    """Sublane alignment in rows: 8 for 4-byte, 16 for 2-byte, 32 for 1-byte dtypes."""
    return max(8, 32 // jnp.dtype(dtype).itemsize)


def _choose_row_tile(rows, d, dtype, max_tile_bytes=_MAX_TILE_BYTES):
    """Sublane-aligned row tile; grid uses cdiv so rows need not divide evenly."""
    align = _sublane_align(dtype)
    bytes_per_row = max(1, d * jnp.dtype(dtype).itemsize)
    # Largest aligned tile under the byte budget (at least one alignment unit).
    max_rows = max(align, (max_tile_bytes // bytes_per_row) // align * align)
    tr = min(rows, max_rows)
    if tr < align:
        # Tiny input: single full-extent block (full-dim block is always legal).
        return rows
    tr = (tr // align) * align
    # Ensure >=2 grid steps when possible so v7x's two TensorCores both get work.
    if tr == rows and rows >= 2 * align:
        tr = align * pl.cdiv(pl.cdiv(rows, 2), align)
    return tr


def dummy_layer_norm(x):
    """DummyLayerNorm.forward is the identity — no kernel launch needed.

    Any kernel here is bounded below by 2x the array bytes of HBM traffic for
    zero compute, so the optimal production implementation is `return x`.
    """
    return x


def dummy_layer_norm_pallas(x):
    """Pallas scaffold for DummyLayerNorm (identity), tuned for HBM bandwidth.

    Row-tiled, lane-dense output, input-aliased output buffer, double-buffered
    auto-pipeline. Kept as a template for extending to a real LayerNorm.
    """
    orig_shape = x.shape
    d = orig_shape[-1]
    rows = x.size // d
    x2 = x.reshape(rows, d)

    tr = _choose_row_tile(rows, d, x.dtype)
    grid = (pl.cdiv(rows, tr),)

    out = pl.pallas_call(
        _identity_kernel,
        out_shape=jax.ShapeDtypeStruct((rows, d), x.dtype),
        grid=grid,
        in_specs=[pl.BlockSpec((tr, d), lambda r: (r, 0))],
        out_specs=pl.BlockSpec((tr, d), lambda r: (r, 0)),
        input_output_aliases={0: 0},  # donate input buffer -> output (caller must donate x)
        compiler_params=pltpu.CompilerParams(
            dimension_semantics=("parallel",),
            vmem_limit_bytes=_VMEM_LIMIT_BYTES,
        ),
    )(x2)
    return out.reshape(orig_shape)


if __name__ == "__main__":
    # DummyLayerNorm(normalized_shape, eps) has no parameters; nothing to init.
    key = jax.random.PRNGKey(0)
    x = jax.random.uniform(key, (2, 4, 768), dtype=jnp.float32)

    # Fast path (what production code should use for this module).
    y_fast = dummy_layer_norm(x)

    # Pallas kernel scaffold — donate a *separate* copy at the jit boundary so
    # input_output_aliases is a real zero-copy donation (x stays live below).
    run_kernel = jax.jit(dummy_layer_norm_pallas, donate_argnums=0)
    x_donated = x + 0.0
    y_kernel = run_kernel(x_donated)
    jax.block_until_ready(y_kernel)

    assert y_fast.shape == x.shape and y_fast.dtype == x.dtype
    assert y_kernel.shape == x.shape and y_kernel.dtype == x.dtype
    assert bool(jnp.all(y_fast == x))
    assert bool(jnp.all(y_kernel == x))
    print("KERNEL_OK")
</pallas_src>

<mosaic_0001>
module attributes {stable_mosaic.version = 11 : i64} {
  func.func @_identity_kernel(%arg0: i32, %arg1: memref<8x768xf32, #tpu.memory_space<vmem>>, %arg2: memref<8x768xf32, #tpu.memory_space<vmem>>) attributes {dimension_semantics = [#tpu.dimension_semantics<parallel>], iteration_bounds = array<i64: 1>, scalar_prefetch = 0 : i64, scratch_operands = 0 : i64, tpu.core_type = #tpu.core_type<tc>, window_params = [{transform_indices = @transform_0, window_bounds = array<i64: 8, 768>}, {transform_indices = @transform_1, window_bounds = array<i64: 8, 768>}]} {
    %c0 = arith.constant 0 : index
    %c0_0 = arith.constant 0 : index
    %0 = vector.load %arg1[%c0, %c0_0] : memref<8x768xf32, #tpu.memory_space<vmem>>, vector<8x768xf32>
    %c0_1 = arith.constant 0 : index
    %c0_2 = arith.constant 0 : index
    %1 = vector.load %arg2[%c0_1, %c0_2] : memref<8x768xf32, #tpu.memory_space<vmem>>, vector<8x768xf32>
    tpu.vector_store %arg2[%c0_1, %c0_2], %0 {strides = array<i32>} : memref<8x768xf32, #tpu.memory_space<vmem>>, vector<8x768xf32>,
    return
  }
  func.func @transform_0(%arg0: i32) -> (i32, i32) {
    %c0_i32 = arith.constant 0 : i32
    %c0_i32_0 = arith.constant 0 : i32
    return %arg0, %c0_i32 : i32, i32
  }
  func.func @transform_1(%arg0: i32) -> (i32, i32) {
    %c0_i32 = arith.constant 0 : i32
    %c0_i32_0 = arith.constant 0 : i32
    return %arg0, %c0_i32 : i32, i32
  }
}

</mosaic_0001>

<llo_original>
// kernel: dummy_layer_norm_pallas.1
$region0: #{dummy_layer_norm_pallas.1}
  #allocation0 [shape = 'u32[]', space=smem, size = 0x4, offset = 0x4, fixed_abs, tag = 'smem constant byte address 0x4 - core index']
  #allocation1 [shape = 'u32[72,128]{1,0:T(1,128)}', space=vmem, size = 0x9000, scoped, tag = 'internal scratch']
  %s0 = inlined_call_operand.vmem [shape: f32[8,768], index: 0, kind: input, shape index: {}, may-alias: {0,1}]
  %s1 = inlined_call_operand.vmem [shape: f32[8,768], index: 1, kind: output, shape index: {}, may-alias: {0,1}]
  %s2 = sld [smem:[#allocation0]]
  $region14: #{dummy_layer_norm_pallas.1} parent=0
    _
  %s4 = ssub.s32 1, %s2
  %s5 = scalar_select 0, %s4, %s2
  // Predicated region
  $region2: #{dummy_layer_norm_pallas.1} parent=0 // pred_check
    _
  $region3: #{dummy_layer_norm_pallas.1} parent=0 // pred_check_branch
    %7 = sbr.rel (0) target = $region5
  $region4: #{dummy_layer_norm_pallas.1} parent=0 // pred_region
    _
  $region5: #{dummy_layer_norm_pallas.1} parent=0 // pred_fallthru
    _
  %v8 = vld [vmem:[%s0] sm:$0xff]
  %v9 = vld [vmem:[%s0 + $0x8] sm:$0xff]
  %v10 = vld [vmem:[%s0 + $0x10] sm:$0xff]
  %v11 = vld [vmem:[%s0 + $0x18] sm:$0xff]
  %v12 = vld [vmem:[%s0 + $0x20] sm:$0xff]
  %v13 = vld [vmem:[%s0 + $0x28] sm:$0xff]
  %14 = vst [vmem:[%s1] sm:$0xff] %v8
  %15 = vst [vmem:[%s1 + $0x8] sm:$0xff] %v9
  %16 = vst [vmem:[%s1 + $0x10] sm:$0xff] %v10
  %17 = vst [vmem:[%s1 + $0x18] sm:$0xff] %v11
  %18 = vst [vmem:[%s1 + $0x20] sm:$0xff] %v12
  %19 = vst [vmem:[%s1 + $0x28] sm:$0xff] %v13
  // Predicated region
  $region6: #{dummy_layer_norm_pallas.1} parent=0 // pred_check
    _
  $region7: #{dummy_layer_norm_pallas.1} parent=0 // pred_check_branch
    %21 = sbr.rel (0) target = $region9
  $region8: #{dummy_layer_norm_pallas.1} parent=0 // pred_region
    _
  $region9: #{dummy_layer_norm_pallas.1} parent=0 // pred_fallthru
    _
  // Predicated region
  $region10: #{dummy_layer_norm_pallas.1} parent=0 // pred_check
    _
  $region11: #{dummy_layer_norm_pallas.1} parent=0 // pred_check_branch
    %23 = sbr.rel (0) target = $region13
  $region12: #{dummy_layer_norm_pallas.1} parent=0 // pred_region
    _
  $region13: #{dummy_layer_norm_pallas.1} parent=0 // pred_fallthru
    _

</llo_original>
